<compile_context>
chip_gen: v5e
topology: v5e:2x2
jax: 0.10.0
libtpu: 0.0.40
codegen_flags: <defaults>
</compile_context>

<pallas_src>
import functools

import jax
import jax.numpy as jnp
from jax.experimental import pallas as pl
from jax.experimental.pallas import tpu as pltpu

LANES = 128


def _policy_kernel(ids_ref, w_ref, b_ref, logits_ref, probs_ref):
    """ids_ref: SMEM (B,) int32; w_ref: VMEM (S, L) f32; b_ref: VMEM (1, L) f32.
    logits_ref / probs_ref: VMEM (B, L) f32 (lane-padded; real actions in [:, :A])."""
    B = logits_ref.shape[0]
    # Row gather: logits[b] = W[state_id[b], :] + bias. B is small and static,
    # so a fully unrolled Python loop is visible to the scheduler.
    rows = [w_ref[pl.ds(ids_ref[b], 1), :] for b in range(B)]    # B x (1, L)
    logits = jnp.concatenate(rows, axis=0) + b_ref[...]          # (B, L)
    logits_ref[...] = logits
    # Fused softmax (predict() path). Padded lanes carry bias = -1e30 -> exp == 0,
    # so reducing over all 128 lanes equals the softmax over the A real actions.
    m = jnp.max(logits, axis=-1, keepdims=True)
    e = jnp.exp(logits - m)                                      # EUP
    denom = jnp.sum(e, axis=-1, keepdims=True)                   # XLU
    probs_ref[...] = e * pl.reciprocal(denom, approx=True)       # EUP, ~free slot


def prepare_params(weight, bias):
    """One-time (outside the rollout loop) lane-padding of PyTorch-layout params.

    weight: [A, S] (nn.Linear layout), bias: [A]  ->  w_pad [S, L], b_pad [1, L],
    L a multiple of 128. Padded bias lanes are -1e30 so the fused softmax ignores them."""
    A, S = weight.shape
    L = ((A + LANES - 1) // LANES) * LANES
    w_pad = jnp.zeros((S, L), jnp.float32).at[:, :A].set(weight.T.astype(jnp.float32))
    b_pad = jnp.full((1, L), -1e30, jnp.float32).at[0, :A].set(bias.astype(jnp.float32))
    return w_pad, b_pad


@functools.partial(jax.jit, static_argnums=(3,))
def policy_estimator_predict(state_ids, w_pad, b_pad, action_size):
    """state_ids: [B] int32 in [0, S). Returns (logits [B, A], probs [B, A])."""
    B = state_ids.shape[0]
    _, L = w_pad.shape
    logits_pad, probs_pad = pl.pallas_call(
        _policy_kernel,
        out_shape=(
            jax.ShapeDtypeStruct((B, L), jnp.float32),
            jax.ShapeDtypeStruct((B, L), jnp.float32),
        ),
        in_specs=[
            pl.BlockSpec(memory_space=pltpu.MemorySpace.SMEM),   # state ids (scalars)
            pl.BlockSpec(memory_space=pltpu.MemorySpace.VMEM),   # padded weight [S, L]
            pl.BlockSpec(memory_space=pltpu.MemorySpace.VMEM),   # padded bias   [1, L]
        ],
        out_specs=(
            pl.BlockSpec(memory_space=pltpu.MemorySpace.VMEM),
            pl.BlockSpec(memory_space=pltpu.MemorySpace.VMEM),
        ),
    )(state_ids, w_pad, b_pad)
    # Slice off the lane padding; under jit this fuses with downstream consumers.
    return logits_pad[:, :action_size], probs_pad[:, :action_size]


if __name__ == "__main__":
    # CliffWalking: 4x12 grid -> state_size = 48, action_size = 4.
    state_size = 48
    action_size = 4
    batch = 8     # batch several rollout states per call to amortize dispatch cost

    key = jax.random.PRNGKey(0)
    k_w, k_b, k_s = jax.random.split(key, 3)

    # nn.Linear default init: uniform(+-1/sqrt(in_features)), PyTorch layout [A, S].
    bound = 1.0 / jnp.sqrt(jnp.float32(state_size))
    weight = jax.random.uniform(
        k_w, (action_size, state_size), jnp.float32, -bound, bound
    )
    bias = jax.random.uniform(k_b, (action_size,), jnp.float32, -bound, bound)

    # One-time padding, hoisted out of the per-step call path.
    w_pad, b_pad = prepare_params(weight, bias)

    # Integer states; the kernel performs the "one-hot" selection itself.
    state_ids = jax.random.randint(k_s, (batch,), 0, state_size, dtype=jnp.int32)

    logits, probs = policy_estimator_predict(state_ids, w_pad, b_pad, action_size)
    jax.block_until_ready((logits, probs))

    # Reference: the original one-hot -> Linear -> softmax path in plain JAX.
    states_one_hot = jax.nn.one_hot(state_ids, state_size, dtype=jnp.float32)
    ref_logits = jnp.dot(states_one_hot, weight.T,
                         precision=jax.lax.Precision.HIGHEST) + bias[None, :]
    ref_probs = jax.nn.softmax(ref_logits, axis=-1)

    assert logits.shape == (batch, action_size)
    assert probs.shape == (batch, action_size)
    assert jnp.allclose(logits, ref_logits, atol=1e-5, rtol=1e-5)
    assert jnp.allclose(probs, ref_probs, atol=2e-3, rtol=2e-3)

    # TODO(synk): PolicyEstimator.update (REINFORCE loss, backward, optimizer step)
    # is a training path and is intentionally not implemented here.

    print("KERNEL_OK")
</pallas_src>

<mosaic_0001>
module attributes {stable_mosaic.version = 11 : i64} {
  func.func @_policy_kernel(%arg0: memref<8xi32, #tpu.memory_space<smem>>, %arg1: memref<48x128xf32, #tpu.memory_space<vmem>>, %arg2: memref<1x128xf32, #tpu.memory_space<vmem>>, %arg3: memref<8x128xf32, #tpu.memory_space<vmem>>, %arg4: memref<8x128xf32, #tpu.memory_space<vmem>>) attributes {dimension_semantics = [], scalar_prefetch = 0 : i64, scratch_operands = 0 : i64, tpu.core_type = #tpu.core_type<tc>} {
    %c0 = arith.constant 0 : index
    %0 = memref.load %arg0[%c0] : memref<8xi32, #tpu.memory_space<smem>>
    %1 = arith.index_cast %0 : i32 to index
    %c0_0 = arith.constant 0 : index
    %2 = vector.load %arg1[%1, %c0_0] : memref<48x128xf32, #tpu.memory_space<vmem>>, vector<1x128xf32>
    %c1 = arith.constant 1 : index
    %3 = memref.load %arg0[%c1] : memref<8xi32, #tpu.memory_space<smem>>
    %4 = arith.index_cast %3 : i32 to index
    %c0_1 = arith.constant 0 : index
    %5 = vector.load %arg1[%4, %c0_1] : memref<48x128xf32, #tpu.memory_space<vmem>>, vector<1x128xf32>
    %c2 = arith.constant 2 : index
    %6 = memref.load %arg0[%c2] : memref<8xi32, #tpu.memory_space<smem>>
    %7 = arith.index_cast %6 : i32 to index
    %c0_2 = arith.constant 0 : index
    %8 = vector.load %arg1[%7, %c0_2] : memref<48x128xf32, #tpu.memory_space<vmem>>, vector<1x128xf32>
    %c3 = arith.constant 3 : index
    %9 = memref.load %arg0[%c3] : memref<8xi32, #tpu.memory_space<smem>>
    %10 = arith.index_cast %9 : i32 to index
    %c0_3 = arith.constant 0 : index
    %11 = vector.load %arg1[%10, %c0_3] : memref<48x128xf32, #tpu.memory_space<vmem>>, vector<1x128xf32>
    %c4 = arith.constant 4 : index
    %12 = memref.load %arg0[%c4] : memref<8xi32, #tpu.memory_space<smem>>
    %13 = arith.index_cast %12 : i32 to index
    %c0_4 = arith.constant 0 : index
    %14 = vector.load %arg1[%13, %c0_4] : memref<48x128xf32, #tpu.memory_space<vmem>>, vector<1x128xf32>
    %c5 = arith.constant 5 : index
    %15 = memref.load %arg0[%c5] : memref<8xi32, #tpu.memory_space<smem>>
    %16 = arith.index_cast %15 : i32 to index
    %c0_5 = arith.constant 0 : index
    %17 = vector.load %arg1[%16, %c0_5] : memref<48x128xf32, #tpu.memory_space<vmem>>, vector<1x128xf32>
    %c6 = arith.constant 6 : index
    %18 = memref.load %arg0[%c6] : memref<8xi32, #tpu.memory_space<smem>>
    %19 = arith.index_cast %18 : i32 to index
    %c0_6 = arith.constant 0 : index
    %20 = vector.load %arg1[%19, %c0_6] : memref<48x128xf32, #tpu.memory_space<vmem>>, vector<1x128xf32>
    %c7 = arith.constant 7 : index
    %21 = memref.load %arg0[%c7] : memref<8xi32, #tpu.memory_space<smem>>
    %22 = arith.index_cast %21 : i32 to index
    %c0_7 = arith.constant 0 : index
    %23 = vector.load %arg1[%22, %c0_7] : memref<48x128xf32, #tpu.memory_space<vmem>>, vector<1x128xf32>
    %24 = tpu.concatenate %2, %5, %8, %11, %14, %17, %20, %23 in 0 : vector<1x128xf32>, vector<1x128xf32>, vector<1x128xf32>, vector<1x128xf32>, vector<1x128xf32>, vector<1x128xf32>, vector<1x128xf32>, vector<1x128xf32> -> vector<8x128xf32>
    %c0_8 = arith.constant 0 : index
    %c0_9 = arith.constant 0 : index
    %25 = vector.load %arg2[%c0_8, %c0_9] : memref<1x128xf32, #tpu.memory_space<vmem>>, vector<1x128xf32>
    %26 = vector.broadcast %25 : vector<1x128xf32> to vector<8x128xf32>
    %27 = arith.addf %24, %26 : vector<8x128xf32>
    %c0_10 = arith.constant 0 : index
    %c0_11 = arith.constant 0 : index
    %28 = vector.load %arg3[%c0_10, %c0_11] : memref<8x128xf32, #tpu.memory_space<vmem>>, vector<8x128xf32>
    tpu.vector_store %arg3[%c0_10, %c0_11], %27 {strides = array<i32>} : memref<8x128xf32, #tpu.memory_space<vmem>>, vector<8x128xf32>,
    %cst = arith.constant dense<0xFF800000> : vector<8xf32>
    %29 = vector.multi_reduction <maximumf>, %27, %cst [1] : vector<8x128xf32> to vector<8xf32>
    %30 = vector.shape_cast %29 : vector<8xf32> to vector<8x1xf32>
    %31 = vector.broadcast %30 : vector<8x1xf32> to vector<8x128xf32>
    %32 = arith.subf %27, %31 : vector<8x128xf32>
    %33 = math.exp %32 : vector<8x128xf32>
    %cst_12 = arith.constant dense<0.000000e+00> : vector<8xf32>
    %34 = vector.multi_reduction <add>, %33, %cst_12 [1] : vector<8x128xf32> to vector<8xf32>
    %35 = vector.shape_cast %34 : vector<8xf32> to vector<8x1xf32>
    %36 = tpu.reciprocal %35 {approx = true} : vector<8x1xf32> -> vector<8x1xf32>
    %37 = vector.broadcast %36 : vector<8x1xf32> to vector<8x128xf32>
    %38 = arith.mulf %33, %37 : vector<8x128xf32>
    %c0_13 = arith.constant 0 : index
    %c0_14 = arith.constant 0 : index
    %39 = vector.load %arg4[%c0_13, %c0_14] : memref<8x128xf32, #tpu.memory_space<vmem>>, vector<8x128xf32>
    tpu.vector_store %arg4[%c0_13, %c0_14], %38 {strides = array<i32>} : memref<8x128xf32, #tpu.memory_space<vmem>>, vector<8x128xf32>,
    return
  }
}

</mosaic_0001>

<llo_original>
// kernel: policy_estimator_predict.1
$region0: #{policy_estimator_predict.1}
  #allocation0 [shape = 'u32[]', space=smem, size = 0x4, offset = 0x4, fixed_abs, tag = 'smem constant byte address 0x4 - core index']
  #allocation1 [shape = 'u32[72,128]{1,0:T(1,128)}', space=vmem, size = 0x9000, scoped, tag = 'internal scratch']
  %s0 = inlined_call_operand.hbm [shape: s32[8], index: 0, kind: input, shape index: {}]
  %s1 = inlined_call_operand.hbm [shape: f32[48,128], index: 1, kind: input, shape index: {}]
  %s2 = inlined_call_operand.vmem [shape: f32[1,128], index: 2, kind: input, shape index: {}]
  %s3 = inlined_call_operand.vmem [shape: f32[8,128], index: 3, kind: output, shape index: {0}]
  %s4 = inlined_call_operand.vmem [shape: f32[8,128], index: 4, kind: output, shape index: {1}]
  %5 = xla_tuple %s3, %s4
  %s6 = sld [smem:[#allocation0]]
  $region38: #{policy_estimator_predict.1} parent=0
    _
  %s8 = ssub.s32 1, %s6
  %s9 = scalar_select 0, %s8, %s6
  $region1: #{policy_estimator_predict.1} parent=0
    #allocation2 [shape = 'u8[512]{0}', space=smem, size = 0x200, scoped, tag = 'input window, operand 0, single buffered']
    #allocation3 [shape = 's32[1]{0}', space=sflag, size = 0x4, scoped, tag = 'scoped memory for policy_estimator_predict.1']
    #allocation4 [shape = 's32[1]{0}', space=sflag, size = 0x4, scoped, tag = 'scoped memory for policy_estimator_predict.1']
    #allocation5 [shape = 'u8[24576]{0}', space=vmem, size = 0x6000, scoped, tag = 'input window, operand 1, single buffered']
    %10 = vsyncpa [#allocation4], 0
    %11 = vsyncpa [#allocation3], 0
    // Predicated region
    $region2: #{policy_estimator_predict.1} parent=1 // pred_check
      _
    $region3: #{policy_estimator_predict.1} parent=1 // pred_check_branch
      %13 = sbr.rel (0) target = $region5
    $region4: #{policy_estimator_predict.1} parent=1 // pred_region
      %15 = vsyncadd [#allocation4], 0
      %s17 = sshll.u32 %s0, 4
      %s18 = int_to_ptr.hbm [resolvable:$true] %s17
      %20 = dma.hbm_to_smem %s18, 16, [#allocation2], [#allocation4]
    $region5: #{policy_estimator_predict.1} parent=1 // pred_fallthru
      _
    // Predicated region
    $region6: #{policy_estimator_predict.1} parent=1 // pred_check
      _
    $region7: #{policy_estimator_predict.1} parent=1 // pred_check_branch
      %22 = sbr.rel (0) target = $region9
    $region8: #{policy_estimator_predict.1} parent=1 // pred_region
      %24 = vsyncadd [#allocation3], 0
      %s25 = sshll.u32 %s1, 4
      %s26 = int_to_ptr.hbm [resolvable:$true] %s25
      %s27 = sshll.u32 [#allocation5], 4
      %s28 = int_to_ptr.vmem [resolvable:$true] %s27
      %33 = dma.hbm_to_vmem [thread:$0]  %s26, 768, %s28, [#allocation3], 128, 128, 8
    $region9: #{policy_estimator_predict.1} parent=1 // pred_fallthru
      _
    // Predicated region
    $region10: #{policy_estimator_predict.1} parent=1 // pred_check
      _
    $region11: #{policy_estimator_predict.1} parent=1 // pred_check_branch
      %35 = sbr.rel (0) target = $region13
    $region12: #{policy_estimator_predict.1} parent=1 // pred_region
      _
    $region13: #{policy_estimator_predict.1} parent=1 // pred_fallthru
      _
    // Predicated region
    $region14: #{policy_estimator_predict.1} parent=1 // pred_check
      _
    $region15: #{policy_estimator_predict.1} parent=1 // pred_check_branch
      %37 = sbr.rel (0) target = $region17
    $region16: #{policy_estimator_predict.1} parent=1 // pred_region
      %39 = dma.done [#allocation4], 16
    $region17: #{policy_estimator_predict.1} parent=1 // pred_fallthru
      _
    // Predicated region
    $region18: #{policy_estimator_predict.1} parent=1 // pred_check
      _
    $region19: #{policy_estimator_predict.1} parent=1 // pred_check_branch
      %41 = sbr.rel (0) target = $region21
    $region20: #{policy_estimator_predict.1} parent=1 // pred_region
      %43 = dma.done [#allocation3], 768
    $region21: #{policy_estimator_predict.1} parent=1 // pred_fallthru
      _
    %44 = sfence
    %s45 = sld [smem:[#allocation2]]
    %s46 = scalar_lea.vmem [#allocation5], %s45
    %v47 = vld [vmem:[%s46] sm:$0x1]
    %s48 = sld [smem:[#allocation2 + $0x1]]
    %s49 = scalar_lea.vmem [#allocation5], %s48
    %v50 = vld [vmem:[%s49] sm:$0x1]
    %s51 = sld [smem:[#allocation2 + $0x2]]
    %s52 = scalar_lea.vmem [#allocation5], %s51
    %v53 = vld [vmem:[%s52] sm:$0x1]
    %s54 = sld [smem:[#allocation2 + $0x3]]
    %s55 = scalar_lea.vmem [#allocation5], %s54
    %v56 = vld [vmem:[%s55] sm:$0x1]
    %s57 = sld [smem:[#allocation2 + $0x4]]
    %s58 = scalar_lea.vmem [#allocation5], %s57
    %v59 = vld [vmem:[%s58] sm:$0x1]
    %s60 = sld [smem:[#allocation2 + $0x5]]
    %s61 = scalar_lea.vmem [#allocation5], %s60
    %v62 = vld [vmem:[%s61] sm:$0x1]
    %s63 = sld [smem:[#allocation2 + $0x6]]
    %s64 = scalar_lea.vmem [#allocation5], %s63
    %v65 = vld [vmem:[%s64] sm:$0x1]
    %s66 = sld [smem:[#allocation2 + $0x7]]
    %s67 = scalar_lea.vmem [#allocation5], %s66
    %v68 = vld [vmem:[%s67] sm:$0x1]
    %v70 = vrot.slane %v50, 7
    %v73 = vrot.slane %v53, 6
    %v76 = vrot.slane %v56, 5
    %v79 = vrot.slane %v59, 4
    %v82 = vrot.slane %v62, 3
    %v85 = vrot.slane %v65, 2
    %v88 = vrot.slane %v68, 1
    %vm90 = vcmask 1040384
    %v91 = vsel %vm90, %v47, %v70
    %vm92 = vcmask 1041408
    %v93 = vsel %vm92, %v91, %v73
    %vm94 = vcmask 1042432
    %v95 = vsel %vm94, %v93, %v76
    %vm96 = vcmask 1043456
    %v97 = vsel %vm96, %v95, %v79
    %vm98 = vcmask 1044480
    %v99 = vsel %vm98, %v97, %v82
    %vm100 = vcmask 1045504
    %v101 = vsel %vm100, %v99, %v85
    %vm102 = vcmask 1046528
    %v103 = vsel %vm102, %v101, %v88
    %v104 = vld [vmem:[%s2] sm:$0x1]
    %v106 = vperm.slane %v104, 0
    %v108 = vadd.f32 %v103, %v106
    %109 = vst [vmem:[%s3] sm:$0xff] %v108
    %110 = vmax.xlane.f32.xlu0 %v108
    %v111 = vpop.xlane.xlu0 %110
    %v112 = vsub.f32 %v108, %v111
    %v113 = vmul.f32 %v112, 1.442695
    %v114 = vpow.pop %v113
    %115 = vadd.xlane.f32.xlu0 %v114
    %v116 = vpop.xlane.xlu0 %115
    %v117 = vrcp.pop %v116
    %v118 = vmul.f32 %v114, %v117
    %119 = vst [vmem:[%s4] sm:$0xff] %v118
    // Predicated region
    $region22: #{policy_estimator_predict.1} parent=1 // pred_check
      _
    $region23: #{policy_estimator_predict.1} parent=1 // pred_check_branch
      %121 = sbr.rel (0) target = $region25
    $region24: #{policy_estimator_predict.1} parent=1 // pred_region
      _
    $region25: #{policy_estimator_predict.1} parent=1 // pred_fallthru
      _
    // Predicated region
    $region26: #{policy_estimator_predict.1} parent=1 // pred_check
      _
    $region27: #{policy_estimator_predict.1} parent=1 // pred_check_branch
      %123 = sbr.rel (0) target = $region29
    $region28: #{policy_estimator_predict.1} parent=1 // pred_region
      _
    $region29: #{policy_estimator_predict.1} parent=1 // pred_fallthru
      _
    // Predicated region
    $region30: #{policy_estimator_predict.1} parent=1 // pred_check
      _
    $region31: #{policy_estimator_predict.1} parent=1 // pred_check_branch
      %125 = sbr.rel (0) target = $region33
    $region32: #{policy_estimator_predict.1} parent=1 // pred_region
      _
    $region33: #{policy_estimator_predict.1} parent=1 // pred_fallthru
      _
    // Predicated region
    $region34: #{policy_estimator_predict.1} parent=1 // pred_check
      _
    $region35: #{policy_estimator_predict.1} parent=1 // pred_check_branch
      %127 = sbr.rel (0) target = $region37
    $region36: #{policy_estimator_predict.1} parent=1 // pred_region
      _
    $region37: #{policy_estimator_predict.1} parent=1 // pred_fallthru
      _
    %128 = vsyncpa [#allocation3], 1
    %129 = vsyncpa [#allocation4], 1

</llo_original>
